<compile_context>
chip_gen: v5e
topology: v5e:2x2
jax: 0.10.0
libtpu: 0.0.40
codegen_flags: <defaults>
</compile_context>

<pallas_src>
import jax
import jax.numpy as jnp
from jax.experimental import pallas as pl
from jax.experimental.pallas import tpu as pltpu

EPS = 1e-15


def _sigmoid(x):
    # exp on the EUP + approx reciprocal (also EUP) keeps the divide off the VALU;
    # the kernel is memory-bound, so both transcendentals hide under the DMA.
    return pl.reciprocal(1.0 + jnp.exp(-x), approx=True)


def _loss_kernel(pred_ref, tgt_ref, anc_ref, cnt_ref, coord_ref, obj_ref):
    # pred_ref / tgt_ref: (5, R, TL)  channels = [obj, x, y, w, h]
    # anc_ref:            (4, R, 1)   [aw, ah, 1/aw, 1/ah] per row, lane-broadcast
    # cnt/coord/obj_ref:  (1, 1)      per-core partial sums (resident accumulators)
    k = pl.program_id(1)

    @pl.when(k == 0)
    def _():
        cnt_ref[...] = jnp.zeros_like(cnt_ref)
        coord_ref[...] = jnp.zeros_like(coord_ref)
        obj_ref[...] = jnp.zeros_like(obj_ref)

    p_obj = pred_ref[0]
    p_x = pred_ref[1]
    p_y = pred_ref[2]
    p_w = pred_ref[3]
    p_h = pred_ref[4]
    t_obj = tgt_ref[0]
    t_x = tgt_ref[1]
    t_y = tgt_ref[2]
    t_w = tgt_ref[3]
    t_h = tgt_ref[4]
    aw = anc_ref[0]       # (R, 1), lane-broadcast against (R, TL)
    ah = anc_ref[1]
    inv_aw = anc_ref[2]
    inv_ah = anc_ref[3]

    # positive-anchor mask as f32 multiply (padded lanes carry t_obj == 0 -> excluded).
    m = (t_obj == 1.0).astype(jnp.float32)
    cnt_ref[...] += jnp.sum(m, keepdims=True)

    # no_obj_loss: CrossEntropyLoss on a single-logit slice -> identically zero,
    # dropped entirely (see header comment).

    # in-place in PyTorch: predictions[..., 1:3] = sigmoid(predictions[..., 1:3])
    sx = _sigmoid(p_x)
    sy = _sigmoid(p_y)
    # in-place in PyTorch: target[..., 3:5] = log(eps + target[..., 3:5] / anchors)
    # (reciprocal anchors precomputed in JAX so the kernel multiplies, no divide).
    lt_w = jnp.log(EPS + t_w * inv_aw)
    lt_h = jnp.log(EPS + t_h * inv_ah)

    # coord_loss numerator: sum over masked cells of the 4 squared coord diffs.
    sq = (sx - t_x) ** 2 + (sy - t_y) ** 2 + (p_w - lt_w) ** 2 + (p_h - lt_h) ** 2
    coord_ref[...] += jnp.sum(m * sq, keepdims=True)

    # box_preds = cat([sigmoid(pred[...,1:3]), exp(pred[...,3:5]) * anchors], -1)
    # pred[...,1:3] was already sigmoided in place -> double sigmoid (intentional).
    bx = _sigmoid(sx)
    by = _sigmoid(sy)
    bw = jnp.exp(p_w) * aw
    bh = jnp.exp(p_h) * ah
    # target boxes use the in-place-modified target (x, y, log-transformed w, h).
    b1x1 = bx - bw * 0.5
    b1x2 = bx + bw * 0.5
    b1y1 = by - bh * 0.5
    b1y2 = by + bh * 0.5
    b2x1 = t_x - lt_w * 0.5
    b2x2 = t_x + lt_w * 0.5
    b2y1 = t_y - lt_h * 0.5
    b2y2 = t_y + lt_h * 0.5
    iw = jnp.maximum(jnp.minimum(b1x2, b2x2) - jnp.maximum(b1x1, b2x1), 0.0)
    ih = jnp.maximum(jnp.minimum(b1y2, b2y2) - jnp.maximum(b1y1, b2y1), 0.0)
    inter = iw * ih
    a1 = jnp.abs((b1x2 - b1x1) * (b1y2 - b1y1))
    a2 = jnp.abs((b2x2 - b2x1) * (b2y2 - b2y1))
    ious = inter * pl.reciprocal(a1 + a2 - inter + 1e-6, approx=True)

    # object_loss numerator: sum over masked cells of (sigmoid(obj) - iou*t_obj)^2.
    s_obj = _sigmoid(p_obj)
    obj_sq = (s_obj - ious * t_obj) ** 2
    obj_ref[...] += jnp.sum(m * obj_sq, keepdims=True)


@jax.jit
def yolo_loss(predictions, target, anchors):
    """predictions: (N, 3, S, S, C>=5), target: (N, 3, S, S, >=5), anchors: (3, 2)."""
    N, A, S1, S2, _ = predictions.shape
    R = N * A
    L = S1 * S2

    # Channel-major repack to (5, R, L). allow_input_fusion lets XLA fuse this
    # slice/reshape/transpose into the pallas_call input instead of forcing an
    # extra HBM round-trip (the whole loss is memory-bound).
    pred_p = jnp.transpose(
        predictions[..., :5].astype(jnp.float32).reshape(R, L, 5), (2, 0, 1))
    tgt_p = jnp.transpose(
        target[..., :5].astype(jnp.float32).reshape(R, L, 5), (2, 0, 1))

    # anchor for row r = n*A + a is anchors[a] (matches reshape(1,3,1,1,2) broadcast);
    # reciprocals are precomputed so the kernel multiplies instead of dividing.
    anc = anchors.astype(jnp.float32)
    anc_rows = jnp.concatenate([anc, 1.0 / anc], axis=1)                    # (3, 4)
    anc_p = jnp.transpose(jnp.tile(anc_rows, (N, 1)), (1, 0))[:, :, None]   # (4, R, 1)

    # --- tiling ---
    P = 2  # leading "parallel" axis: both TensorCores on v7x; harmless elsewhere.
    # Lane tile: multiple of 128, as large as possible while
    #   2 tensors * 2 pipeline buffers * 5 ch * R * TL * 4 B  <~ 12 MiB
    # so double-buffering fits even v5e's 16 MiB default scoped VMEM and stays well
    # under v7x's 64 MiB physical VMEM (limit also pinned explicitly below).
    vmem_budget = 12 * 1024 * 1024
    tl_cap = max(128, (vmem_budget // (80 * R)) // 128 * 128)
    TL = min(2048, tl_cap)
    per_core = -(-L // P)                                  # lanes per parallel slot
    TL = min(TL, max(128, -(-per_core // 128) * 128))
    L_pad = -(-L // (P * TL)) * (P * TL)
    if L_pad != L:
        pad = ((0, 0), (0, 0), (0, L_pad - L))
        pred_p = jnp.pad(pred_p, pad)   # zeros
        tgt_p = jnp.pad(tgt_p, pad)     # padded t_obj == 0 -> excluded from all sums
    KT = L_pad // (P * TL)

    cnt, coord_sum, obj_sum = pl.pallas_call(
        _loss_kernel,
        out_shape=(
            jax.ShapeDtypeStruct((P, 1, 1), jnp.float32),
            jax.ShapeDtypeStruct((P, 1, 1), jnp.float32),
            jax.ShapeDtypeStruct((P, 1, 1), jnp.float32),
        ),
        grid=(P, KT),
        in_specs=[
            pl.BlockSpec((5, R, TL), lambda p, k: (0, 0, p * KT + k)),
            pl.BlockSpec((5, R, TL), lambda p, k: (0, 0, p * KT + k)),
            pl.BlockSpec((4, R, 1), lambda p, k: (0, 0, 0)),
        ],
        out_specs=(
            pl.BlockSpec((None, 1, 1), lambda p, k: (p, 0, 0)),
            pl.BlockSpec((None, 1, 1), lambda p, k: (p, 0, 0)),
            pl.BlockSpec((None, 1, 1), lambda p, k: (p, 0, 0)),
        ),
        compiler_params=pltpu.CompilerParams(
            dimension_semantics=("parallel", "arbitrary"),
            allow_input_fusion=[True, True, True],
            vmem_limit_bytes=32 * 1024 * 1024,
        ),
    )(pred_p, tgt_p, anc_p)

    # Combine the (<=2) per-core partials + final divides: a few scalar flops in JAX.
    count = jnp.sum(cnt)        # NOTE: 0 positive anchors -> NaN, same as PyTorch ref
    coord_loss = jnp.sum(coord_sum) / (4.0 * count)   # MSELoss mean over M*4 elements
    object_loss = jnp.sum(obj_sum) / count            # MSELoss mean over M elements
    # lambdas: box=10, obj=1; noobj CE term is identically zero (single logit).
    return 10.0 * coord_loss + 1.0 * object_loss


if __name__ == "__main__":
    key = jax.random.PRNGKey(0)
    k1, k2, k3, k4 = jax.random.split(key, 4)
    N, A, S, C = 2, 3, 16, 7  # C = 5 box/obj channels + 2 class logits (unused)

    predictions = jax.random.normal(k1, (N, A, S, S, C), dtype=jnp.float32)
    t_obj = jax.random.bernoulli(k2, 0.3, (N, A, S, S, 1)).astype(jnp.float32)
    t_xy = jax.random.uniform(k3, (N, A, S, S, 2), jnp.float32, 0.05, 0.95)
    t_wh = jax.random.uniform(k4, (N, A, S, S, 2), jnp.float32, 0.1, 2.0)
    t_cls = jnp.zeros((N, A, S, S, 1), jnp.float32)
    target = jnp.concatenate([t_obj, t_xy, t_wh, t_cls], axis=-1)

    anchors = jnp.array([[0.28, 0.22], [0.38, 0.48], [0.90, 0.78]], jnp.float32)

    loss = yolo_loss(predictions, target, anchors)
    jax.block_until_ready(loss)
    print("KERNEL_OK")
</pallas_src>

<mosaic_0001>
module attributes {stable_mosaic.version = 11 : i64} {
  func.func @_loss_kernel(%arg0: i32, %arg1: i32, %arg2: memref<5x6x128xf32, #tpu.memory_space<vmem>>, %arg3: memref<5x6x128xf32, #tpu.memory_space<vmem>>, %arg4: memref<4x6x1xf32, #tpu.memory_space<vmem>>, %arg5: memref<1x1x1xf32, #tpu.memory_space<vmem>>, %arg6: memref<1x1x1xf32, #tpu.memory_space<vmem>>, %arg7: memref<1x1x1xf32, #tpu.memory_space<vmem>>) attributes {dimension_semantics = [#tpu.dimension_semantics<parallel>, #tpu.dimension_semantics<arbitrary>], iteration_bounds = array<i64: 2, 1>, scalar_prefetch = 0 : i64, scratch_operands = 0 : i64, tpu.core_type = #tpu.core_type<tc>, window_params = [{transform_indices = @transform_0, window_bounds = array<i64: 5, 6, 128>}, {transform_indices = @transform_1, window_bounds = array<i64: 5, 6, 128>}, {pipeline_mode = #tpu.pipeline_mode<synchronous>, transform_indices = @transform_2, window_bounds = array<i64: 4, 6, 1>}, {transform_indices = @transform_3, window_bounds = array<i64: 1, 1, 1>}, {transform_indices = @transform_4, window_bounds = array<i64: 1, 1, 1>}, {transform_indices = @transform_5, window_bounds = array<i64: 1, 1, 1>}]} {
    %c0_i32 = arith.constant 0 : i32
    %0 = arith.cmpi eq, %arg1, %c0_i32 : i32
    %1 = arith.extui %0 : i1 to i32
    %c0_i32_0 = arith.constant 0 : i32
    %2 = arith.cmpi ne, %1, %c0_i32_0 : i32
    scf.if %2 {
      %cst_82 = arith.constant 0.000000e+00 : f32
      %179 = vector.broadcast %cst_82 : f32 to vector<1x1xf32>
      %c0_83 = arith.constant 0 : index
      %c0_84 = arith.constant 0 : index
      %c0_85 = arith.constant 0 : index
      %180 = vector.load %arg5[%c0_83, %c0_84, %c0_85] : memref<1x1x1xf32, #tpu.memory_space<vmem>>, vector<1x1x1xf32>
      %181 = vector.shape_cast %180 : vector<1x1x1xf32> to vector<1x1xf32>
      %182 = vector.shape_cast %179 : vector<1x1xf32> to vector<1x1x1xf32>
      tpu.vector_store %arg5[%c0_83, %c0_84, %c0_85], %182 {strides = array<i32>} : memref<1x1x1xf32, #tpu.memory_space<vmem>>, vector<1x1x1xf32>,
      %cst_86 = arith.constant 0.000000e+00 : f32
      %183 = vector.broadcast %cst_86 : f32 to vector<1x1xf32>
      %c0_87 = arith.constant 0 : index
      %c0_88 = arith.constant 0 : index
      %c0_89 = arith.constant 0 : index
      %184 = vector.load %arg6[%c0_87, %c0_88, %c0_89] : memref<1x1x1xf32, #tpu.memory_space<vmem>>, vector<1x1x1xf32>
      %185 = vector.shape_cast %184 : vector<1x1x1xf32> to vector<1x1xf32>
      %186 = vector.shape_cast %183 : vector<1x1xf32> to vector<1x1x1xf32>
      tpu.vector_store %arg6[%c0_87, %c0_88, %c0_89], %186 {strides = array<i32>} : memref<1x1x1xf32, #tpu.memory_space<vmem>>, vector<1x1x1xf32>,
      %cst_90 = arith.constant 0.000000e+00 : f32
      %187 = vector.broadcast %cst_90 : f32 to vector<1x1xf32>
      %c0_91 = arith.constant 0 : index
      %c0_92 = arith.constant 0 : index
      %c0_93 = arith.constant 0 : index
      %188 = vector.load %arg7[%c0_91, %c0_92, %c0_93] : memref<1x1x1xf32, #tpu.memory_space<vmem>>, vector<1x1x1xf32>
      %189 = vector.shape_cast %188 : vector<1x1x1xf32> to vector<1x1xf32>
      %190 = vector.shape_cast %187 : vector<1x1xf32> to vector<1x1x1xf32>
      tpu.vector_store %arg7[%c0_91, %c0_92, %c0_93], %190 {strides = array<i32>} : memref<1x1x1xf32, #tpu.memory_space<vmem>>, vector<1x1x1xf32>,
    } else {
    }
    %c0 = arith.constant 0 : index
    %c0_1 = arith.constant 0 : index
    %c0_2 = arith.constant 0 : index
    %3 = vector.load %arg2[%c0, %c0_1, %c0_2] : memref<5x6x128xf32, #tpu.memory_space<vmem>>, vector<1x6x128xf32>
    %4 = vector.shape_cast %3 : vector<1x6x128xf32> to vector<6x128xf32>
    %c1 = arith.constant 1 : index
    %c0_3 = arith.constant 0 : index
    %c0_4 = arith.constant 0 : index
    %5 = vector.load %arg2[%c1, %c0_3, %c0_4] : memref<5x6x128xf32, #tpu.memory_space<vmem>>, vector<1x6x128xf32>
    %6 = vector.shape_cast %5 : vector<1x6x128xf32> to vector<6x128xf32>
    %c2 = arith.constant 2 : index
    %c0_5 = arith.constant 0 : index
    %c0_6 = arith.constant 0 : index
    %7 = vector.load %arg2[%c2, %c0_5, %c0_6] : memref<5x6x128xf32, #tpu.memory_space<vmem>>, vector<1x6x128xf32>
    %8 = vector.shape_cast %7 : vector<1x6x128xf32> to vector<6x128xf32>
    %c3 = arith.constant 3 : index
    %c0_7 = arith.constant 0 : index
    %c0_8 = arith.constant 0 : index
    %9 = vector.load %arg2[%c3, %c0_7, %c0_8] : memref<5x6x128xf32, #tpu.memory_space<vmem>>, vector<1x6x128xf32>
    %10 = vector.shape_cast %9 : vector<1x6x128xf32> to vector<6x128xf32>
    %c4 = arith.constant 4 : index
    %c0_9 = arith.constant 0 : index
    %c0_10 = arith.constant 0 : index
    %11 = vector.load %arg2[%c4, %c0_9, %c0_10] : memref<5x6x128xf32, #tpu.memory_space<vmem>>, vector<1x6x128xf32>
    %12 = vector.shape_cast %11 : vector<1x6x128xf32> to vector<6x128xf32>
    %c0_11 = arith.constant 0 : index
    %c0_12 = arith.constant 0 : index
    %c0_13 = arith.constant 0 : index
    %13 = vector.load %arg3[%c0_11, %c0_12, %c0_13] : memref<5x6x128xf32, #tpu.memory_space<vmem>>, vector<1x6x128xf32>
    %14 = vector.shape_cast %13 : vector<1x6x128xf32> to vector<6x128xf32>
    %c1_14 = arith.constant 1 : index
    %c0_15 = arith.constant 0 : index
    %c0_16 = arith.constant 0 : index
    %15 = vector.load %arg3[%c1_14, %c0_15, %c0_16] : memref<5x6x128xf32, #tpu.memory_space<vmem>>, vector<1x6x128xf32>
    %16 = vector.shape_cast %15 : vector<1x6x128xf32> to vector<6x128xf32>
    %c2_17 = arith.constant 2 : index
    %c0_18 = arith.constant 0 : index
    %c0_19 = arith.constant 0 : index
    %17 = vector.load %arg3[%c2_17, %c0_18, %c0_19] : memref<5x6x128xf32, #tpu.memory_space<vmem>>, vector<1x6x128xf32>
    %18 = vector.shape_cast %17 : vector<1x6x128xf32> to vector<6x128xf32>
    %c3_20 = arith.constant 3 : index
    %c0_21 = arith.constant 0 : index
    %c0_22 = arith.constant 0 : index
    %19 = vector.load %arg3[%c3_20, %c0_21, %c0_22] : memref<5x6x128xf32, #tpu.memory_space<vmem>>, vector<1x6x128xf32>
    %20 = vector.shape_cast %19 : vector<1x6x128xf32> to vector<6x128xf32>
    %c4_23 = arith.constant 4 : index
    %c0_24 = arith.constant 0 : index
    %c0_25 = arith.constant 0 : index
    %21 = vector.load %arg3[%c4_23, %c0_24, %c0_25] : memref<5x6x128xf32, #tpu.memory_space<vmem>>, vector<1x6x128xf32>
    %22 = vector.shape_cast %21 : vector<1x6x128xf32> to vector<6x128xf32>
    %c0_26 = arith.constant 0 : index
    %c0_27 = arith.constant 0 : index
    %c0_28 = arith.constant 0 : index
    %23 = vector.load %arg4[%c0_26, %c0_27, %c0_28] : memref<4x6x1xf32, #tpu.memory_space<vmem>>, vector<1x6x1xf32>
    %24 = vector.shape_cast %23 : vector<1x6x1xf32> to vector<6x1xf32>
    %c1_29 = arith.constant 1 : index
    %c0_30 = arith.constant 0 : index
    %c0_31 = arith.constant 0 : index
    %25 = vector.load %arg4[%c1_29, %c0_30, %c0_31] : memref<4x6x1xf32, #tpu.memory_space<vmem>>, vector<1x6x1xf32>
    %26 = vector.shape_cast %25 : vector<1x6x1xf32> to vector<6x1xf32>
    %c2_32 = arith.constant 2 : index
    %c0_33 = arith.constant 0 : index
    %c0_34 = arith.constant 0 : index
    %27 = vector.load %arg4[%c2_32, %c0_33, %c0_34] : memref<4x6x1xf32, #tpu.memory_space<vmem>>, vector<1x6x1xf32>
    %28 = vector.shape_cast %27 : vector<1x6x1xf32> to vector<6x1xf32>
    %c3_35 = arith.constant 3 : index
    %c0_36 = arith.constant 0 : index
    %c0_37 = arith.constant 0 : index
    %29 = vector.load %arg4[%c3_35, %c0_36, %c0_37] : memref<4x6x1xf32, #tpu.memory_space<vmem>>, vector<1x6x1xf32>
    %30 = vector.shape_cast %29 : vector<1x6x1xf32> to vector<6x1xf32>
    %cst = arith.constant 1.000000e+00 : f32
    %31 = vector.broadcast %cst : f32 to vector<6x128xf32>
    %32 = arith.cmpf oeq, %14, %31 : vector<6x128xf32>
    %33 = arith.extui %32 : vector<6x128xi1> to vector<6x128xi32>
    %34 = arith.sitofp %33 : vector<6x128xi32> to vector<6x128xf32>
    %c0_38 = arith.constant 0 : index
    %c0_39 = arith.constant 0 : index
    %c0_40 = arith.constant 0 : index
    %35 = vector.load %arg5[%c0_38, %c0_39, %c0_40] : memref<1x1x1xf32, #tpu.memory_space<vmem>>, vector<1x1x1xf32>
    %36 = vector.shape_cast %35 : vector<1x1x1xf32> to vector<1x1xf32>
    %37 = vector.shape_cast %34 : vector<6x128xf32> to vector<1x6x128xf32>
    %cst_41 = arith.constant dense<0.000000e+00> : vector<1xf32>
    %38 = vector.multi_reduction <add>, %37, %cst_41 [1, 2] : vector<1x6x128xf32> to vector<1xf32>
    %39 = vector.shape_cast %38 : vector<1xf32> to vector<1x1x1xf32>
    %40 = vector.extract %39[0, 0, 0] : f32 from vector<1x1x1xf32>
    %41 = vector.broadcast %40 : f32 to vector<1x1xf32>
    %42 = arith.addf %36, %41 : vector<1x1xf32>
    %c0_42 = arith.constant 0 : index
    %c0_43 = arith.constant 0 : index
    %c0_44 = arith.constant 0 : index
    %43 = vector.load %arg5[%c0_42, %c0_43, %c0_44] : memref<1x1x1xf32, #tpu.memory_space<vmem>>, vector<1x1x1xf32>
    %44 = vector.shape_cast %43 : vector<1x1x1xf32> to vector<1x1xf32>
    %45 = vector.shape_cast %42 : vector<1x1xf32> to vector<1x1x1xf32>
    tpu.vector_store %arg5[%c0_42, %c0_43, %c0_44], %45 {strides = array<i32>} : memref<1x1x1xf32, #tpu.memory_space<vmem>>, vector<1x1x1xf32>,
    %cst_45 = arith.constant 0.000000e+00 : f32
    %46 = vector.broadcast %cst_45 : f32 to vector<6x128xf32>
    %47 = arith.subf %46, %6 : vector<6x128xf32>
    %48 = math.exp %47 : vector<6x128xf32>
    %cst_46 = arith.constant 1.000000e+00 : f32
    %49 = vector.broadcast %cst_46 : f32 to vector<6x128xf32>
    %50 = arith.addf %49, %48 : vector<6x128xf32>
    %51 = tpu.reciprocal %50 {approx = true} : vector<6x128xf32> -> vector<6x128xf32>
    %cst_47 = arith.constant 0.000000e+00 : f32
    %52 = vector.broadcast %cst_47 : f32 to vector<6x128xf32>
    %53 = arith.subf %52, %8 : vector<6x128xf32>
    %54 = math.exp %53 : vector<6x128xf32>
    %cst_48 = arith.constant 1.000000e+00 : f32
    %55 = vector.broadcast %cst_48 : f32 to vector<6x128xf32>
    %56 = arith.addf %55, %54 : vector<6x128xf32>
    %57 = tpu.reciprocal %56 {approx = true} : vector<6x128xf32> -> vector<6x128xf32>
    %58 = vector.broadcast %28 : vector<6x1xf32> to vector<6x128xf32>
    %59 = arith.mulf %20, %58 : vector<6x128xf32>
    %cst_49 = arith.constant 1.000000e-15 : f32
    %60 = vector.broadcast %cst_49 : f32 to vector<6x128xf32>
    %61 = arith.addf %60, %59 : vector<6x128xf32>
    %62 = math.log %61 : vector<6x128xf32>
    %63 = vector.broadcast %30 : vector<6x1xf32> to vector<6x128xf32>
    %64 = arith.mulf %22, %63 : vector<6x128xf32>
    %cst_50 = arith.constant 1.000000e-15 : f32
    %65 = vector.broadcast %cst_50 : f32 to vector<6x128xf32>
    %66 = arith.addf %65, %64 : vector<6x128xf32>
    %67 = math.log %66 : vector<6x128xf32>
    %68 = arith.subf %51, %16 : vector<6x128xf32>
    %69 = arith.mulf %68, %68 : vector<6x128xf32>
    %70 = arith.subf %57, %18 : vector<6x128xf32>
    %71 = arith.mulf %70, %70 : vector<6x128xf32>
    %72 = arith.addf %69, %71 : vector<6x128xf32>
    %73 = arith.subf %10, %62 : vector<6x128xf32>
    %74 = arith.mulf %73, %73 : vector<6x128xf32>
    %75 = arith.addf %72, %74 : vector<6x128xf32>
    %76 = arith.subf %12, %67 : vector<6x128xf32>
    %77 = arith.mulf %76, %76 : vector<6x128xf32>
    %78 = arith.addf %75, %77 : vector<6x128xf32>
    %c0_51 = arith.constant 0 : index
    %c0_52 = arith.constant 0 : index
    %c0_53 = arith.constant 0 : index
    %79 = vector.load %arg6[%c0_51, %c0_52, %c0_53] : memref<1x1x1xf32, #tpu.memory_space<vmem>>, vector<1x1x1xf32>
    %80 = vector.shape_cast %79 : vector<1x1x1xf32> to vector<1x1xf32>
    %81 = arith.mulf %34, %78 : vector<6x128xf32>
    %82 = vector.shape_cast %81 : vector<6x128xf32> to vector<1x6x128xf32>
    %cst_54 = arith.constant dense<0.000000e+00> : vector<1xf32>
    %83 = vector.multi_reduction <add>, %82, %cst_54 [1, 2] : vector<1x6x128xf32> to vector<1xf32>
    %84 = vector.shape_cast %83 : vector<1xf32> to vector<1x1x1xf32>
    %85 = vector.extract %84[0, 0, 0] : f32 from vector<1x1x1xf32>
    %86 = vector.broadcast %85 : f32 to vector<1x1xf32>
    %87 = arith.addf %80, %86 : vector<1x1xf32>
    %c0_55 = arith.constant 0 : index
    %c0_56 = arith.constant 0 : index
    %c0_57 = arith.constant 0 : index
    %88 = vector.load %arg6[%c0_55, %c0_56, %c0_57] : memref<1x1x1xf32, #tpu.memory_space<vmem>>, vector<1x1x1xf32>
    %89 = vector.shape_cast %88 : vector<1x1x1xf32> to vector<1x1xf32>
    %90 = vector.shape_cast %87 : vector<1x1xf32> to vector<1x1x1xf32>
    tpu.vector_store %arg6[%c0_55, %c0_56, %c0_57], %90 {strides = array<i32>} : memref<1x1x1xf32, #tpu.memory_space<vmem>>, vector<1x1x1xf32>,
    %cst_58 = arith.constant 0.000000e+00 : f32
    %91 = vector.broadcast %cst_58 : f32 to vector<6x128xf32>
    %92 = arith.subf %91, %51 : vector<6x128xf32>
    %93 = math.exp %92 : vector<6x128xf32>
    %cst_59 = arith.constant 1.000000e+00 : f32
    %94 = vector.broadcast %cst_59 : f32 to vector<6x128xf32>
    %95 = arith.addf %94, %93 : vector<6x128xf32>
    %96 = tpu.reciprocal %95 {approx = true} : vector<6x128xf32> -> vector<6x128xf32>
    %cst_60 = arith.constant 0.000000e+00 : f32
    %97 = vector.broadcast %cst_60 : f32 to vector<6x128xf32>
    %98 = arith.subf %97, %57 : vector<6x128xf32>
    %99 = math.exp %98 : vector<6x128xf32>
    %cst_61 = arith.constant 1.000000e+00 : f32
    %100 = vector.broadcast %cst_61 : f32 to vector<6x128xf32>
    %101 = arith.addf %100, %99 : vector<6x128xf32>
    %102 = tpu.reciprocal %101 {approx = true} : vector<6x128xf32> -> vector<6x128xf32>
    %103 = math.exp %10 : vector<6x128xf32>
    %104 = vector.broadcast %24 : vector<6x1xf32> to vector<6x128xf32>
    %105 = arith.mulf %103, %104 : vector<6x128xf32>
    %106 = math.exp %12 : vector<6x128xf32>
    %107 = vector.broadcast %26 : vector<6x1xf32> to vector<6x128xf32>
    %108 = arith.mulf %106, %107 : vector<6x128xf32>
    %cst_62 = arith.constant 5.000000e-01 : f32
    %109 = vector.broadcast %cst_62 : f32 to vector<6x128xf32>
    %110 = arith.mulf %105, %109 : vector<6x128xf32>
    %111 = arith.subf %96, %110 : vector<6x128xf32>
    %cst_63 = arith.constant 5.000000e-01 : f32
    %112 = vector.broadcast %cst_63 : f32 to vector<6x128xf32>
    %113 = arith.mulf %105, %112 : vector<6x128xf32>
    %114 = arith.addf %96, %113 : vector<6x128xf32>
    %cst_64 = arith.constant 5.000000e-01 : f32
    %115 = vector.broadcast %cst_64 : f32 to vector<6x128xf32>
    %116 = arith.mulf %108, %115 : vector<6x128xf32>
    %117 = arith.subf %102, %116 : vector<6x128xf32>
    %cst_65 = arith.constant 5.000000e-01 : f32
    %118 = vector.broadcast %cst_65 : f32 to vector<6x128xf32>
    %119 = arith.mulf %108, %118 : vector<6x128xf32>
    %120 = arith.addf %102, %119 : vector<6x128xf32>
    %cst_66 = arith.constant 5.000000e-01 : f32
    %121 = vector.broadcast %cst_66 : f32 to vector<6x128xf32>
    %122 = arith.mulf %62, %121 : vector<6x128xf32>
    %123 = arith.subf %16, %122 : vector<6x128xf32>
    %cst_67 = arith.constant 5.000000e-01 : f32
    %124 = vector.broadcast %cst_67 : f32 to vector<6x128xf32>
    %125 = arith.mulf %62, %124 : vector<6x128xf32>
    %126 = arith.addf %16, %125 : vector<6x128xf32>
    %cst_68 = arith.constant 5.000000e-01 : f32
    %127 = vector.broadcast %cst_68 : f32 to vector<6x128xf32>
    %128 = arith.mulf %67, %127 : vector<6x128xf32>
    %129 = arith.subf %18, %128 : vector<6x128xf32>
    %cst_69 = arith.constant 5.000000e-01 : f32
    %130 = vector.broadcast %cst_69 : f32 to vector<6x128xf32>
    %131 = arith.mulf %67, %130 : vector<6x128xf32>
    %132 = arith.addf %18, %131 : vector<6x128xf32>
    %133 = arith.minimumf %114, %126 : vector<6x128xf32>
    %134 = arith.maximumf %111, %123 : vector<6x128xf32>
    %135 = arith.subf %133, %134 : vector<6x128xf32>
    %cst_70 = arith.constant 0.000000e+00 : f32
    %136 = vector.broadcast %cst_70 : f32 to vector<6x128xf32>
    %137 = arith.maximumf %135, %136 : vector<6x128xf32>
    %138 = arith.minimumf %120, %132 : vector<6x128xf32>
    %139 = arith.maximumf %117, %129 : vector<6x128xf32>
    %140 = arith.subf %138, %139 : vector<6x128xf32>
    %cst_71 = arith.constant 0.000000e+00 : f32
    %141 = vector.broadcast %cst_71 : f32 to vector<6x128xf32>
    %142 = arith.maximumf %140, %141 : vector<6x128xf32>
    %143 = arith.mulf %137, %142 : vector<6x128xf32>
    %144 = arith.subf %114, %111 : vector<6x128xf32>
    %145 = arith.subf %120, %117 : vector<6x128xf32>
    %146 = arith.mulf %144, %145 : vector<6x128xf32>
    %147 = math.absf %146 : vector<6x128xf32>
    %148 = arith.subf %126, %123 : vector<6x128xf32>
    %149 = arith.subf %132, %129 : vector<6x128xf32>
    %150 = arith.mulf %148, %149 : vector<6x128xf32>
    %151 = math.absf %150 : vector<6x128xf32>
    %152 = arith.addf %147, %151 : vector<6x128xf32>
    %153 = arith.subf %152, %143 : vector<6x128xf32>
    %cst_72 = arith.constant 9.99999997E-7 : f32
    %154 = vector.broadcast %cst_72 : f32 to vector<6x128xf32>
    %155 = arith.addf %153, %154 : vector<6x128xf32>
    %156 = tpu.reciprocal %155 {approx = true} : vector<6x128xf32> -> vector<6x128xf32>
    %157 = arith.mulf %143, %156 : vector<6x128xf32>
    %cst_73 = arith.constant 0.000000e+00 : f32
    %158 = vector.broadcast %cst_73 : f32 to vector<6x128xf32>
    %159 = arith.subf %158, %4 : vector<6x128xf32>
    %160 = math.exp %159 : vector<6x128xf32>
    %cst_74 = arith.constant 1.000000e+00 : f32
    %161 = vector.broadcast %cst_74 : f32 to vector<6x128xf32>
    %162 = arith.addf %161, %160 : vector<6x128xf32>
    %163 = tpu.reciprocal %162 {approx = true} : vector<6x128xf32> -> vector<6x128xf32>
    %164 = arith.mulf %157, %14 : vector<6x128xf32>
    %165 = arith.subf %163, %164 : vector<6x128xf32>
    %166 = arith.mulf %165, %165 : vector<6x128xf32>
    %c0_75 = arith.constant 0 : index
    %c0_76 = arith.constant 0 : index
    %c0_77 = arith.constant 0 : index
    %167 = vector.load %arg7[%c0_75, %c0_76, %c0_77] : memref<1x1x1xf32, #tpu.memory_space<vmem>>, vector<1x1x1xf32>
    %168 = vector.shape_cast %167 : vector<1x1x1xf32> to vector<1x1xf32>
    %169 = arith.mulf %34, %166 : vector<6x128xf32>
    %170 = vector.shape_cast %169 : vector<6x128xf32> to vector<1x6x128xf32>
    %cst_78 = arith.constant dense<0.000000e+00> : vector<1xf32>
    %171 = vector.multi_reduction <add>, %170, %cst_78 [1, 2] : vector<1x6x128xf32> to vector<1xf32>
    %172 = vector.shape_cast %171 : vector<1xf32> to vector<1x1x1xf32>
    %173 = vector.extract %172[0, 0, 0] : f32 from vector<1x1x1xf32>
    %174 = vector.broadcast %173 : f32 to vector<1x1xf32>
    %175 = arith.addf %168, %174 : vector<1x1xf32>
    %c0_79 = arith.constant 0 : index
    %c0_80 = arith.constant 0 : index
    %c0_81 = arith.constant 0 : index
    %176 = vector.load %arg7[%c0_79, %c0_80, %c0_81] : memref<1x1x1xf32, #tpu.memory_space<vmem>>, vector<1x1x1xf32>
    %177 = vector.shape_cast %176 : vector<1x1x1xf32> to vector<1x1xf32>
    %178 = vector.shape_cast %175 : vector<1x1xf32> to vector<1x1x1xf32>
    tpu.vector_store %arg7[%c0_79, %c0_80, %c0_81], %178 {strides = array<i32>} : memref<1x1x1xf32, #tpu.memory_space<vmem>>, vector<1x1x1xf32>,
    return
  }
  func.func @transform_0(%arg0: i32, %arg1: i32) -> (i32, i32, i32) {
    %c1_i32 = arith.constant 1 : i32
    %0 = arith.muli %arg0, %c1_i32 : i32
    %1 = arith.addi %0, %arg1 : i32
    %c0_i32 = arith.constant 0 : i32
    %c0_i32_0 = arith.constant 0 : i32
    %c0_i32_1 = arith.constant 0 : i32
    return %c0_i32, %c0_i32_0, %1 : i32, i32, i32
  }
  func.func @transform_1(%arg0: i32, %arg1: i32) -> (i32, i32, i32) {
    %c1_i32 = arith.constant 1 : i32
    %0 = arith.muli %arg0, %c1_i32 : i32
    %1 = arith.addi %0, %arg1 : i32
    %c0_i32 = arith.constant 0 : i32
    %c0_i32_0 = arith.constant 0 : i32
    %c0_i32_1 = arith.constant 0 : i32
    return %c0_i32, %c0_i32_0, %1 : i32, i32, i32
  }
  func.func @transform_2(%arg0: i32, %arg1: i32) -> (i32, i32, i32) {
    %c0_i32 = arith.constant 0 : i32
    %c0_i32_0 = arith.constant 0 : i32
    %c0_i32_1 = arith.constant 0 : i32
    %c0_i32_2 = arith.constant 0 : i32
    return %c0_i32, %c0_i32_0, %c0_i32_1 : i32, i32, i32
  }
  func.func @transform_3(%arg0: i32, %arg1: i32) -> (i32, i32, i32) {
    %c0_i32 = arith.constant 0 : i32
    %c0_i32_0 = arith.constant 0 : i32
    %c0_i32_1 = arith.constant 0 : i32
    return %arg0, %c0_i32, %c0_i32_0 : i32, i32, i32
  }
  func.func @transform_4(%arg0: i32, %arg1: i32) -> (i32, i32, i32) {
    %c0_i32 = arith.constant 0 : i32
    %c0_i32_0 = arith.constant 0 : i32
    %c0_i32_1 = arith.constant 0 : i32
    return %arg0, %c0_i32, %c0_i32_0 : i32, i32, i32
  }
  func.func @transform_5(%arg0: i32, %arg1: i32) -> (i32, i32, i32) {
    %c0_i32 = arith.constant 0 : i32
    %c0_i32_0 = arith.constant 0 : i32
    %c0_i32_1 = arith.constant 0 : i32
    return %arg0, %c0_i32, %c0_i32_0 : i32, i32, i32
  }
}

</mosaic_0001>

<llo_original>
// kernel: tile.9
$region0: #{tile.9}
  %s0 = inlined_call_operand.vmem [shape: f32[2,3,4], index: 0, kind: input, shape index: {}]
  %s1 = inlined_call_operand.vmem [shape: f32[6,4], index: 1, kind: output, shape index: {}]
  $region1: #{tile.9} parent=0
    #allocation0 [shape = 'u8[4096]{0}', space=vmem, size = 0x1000, scoped, tag = 'scoped mem for output reshape']
    #allocation1 [shape = 'u8[16384]{0}', space=vmem, size = 0x4000, scoped, tag = 'scoped mem for input reshape']
    %s3 = ssub.s32 4, 1
    %s4 = scalar_lea.vmem %s0, 6
    %v5 = vld [vmem:[%s4] sm:%s3]
    %s6 = scalar_lea.vmem [#allocation1], 24
    %7 = vst [vmem:[%s6] sm:%s3] %v5
    %s8 = scalar_lea.vmem %s0, 4
    %v9 = vld [vmem:[%s8] sm:%s3]
    %s10 = scalar_lea.vmem [#allocation1], 16
    %11 = vst [vmem:[%s10] sm:%s3] %v9
    %s12 = scalar_lea.vmem %s0, 2
    %v13 = vld [vmem:[%s12] sm:%s3]
    %s14 = scalar_lea.vmem [#allocation1], 8
    %15 = vst [vmem:[%s14] sm:%s3] %v13
    %v16 = vld [vmem:[%s0] sm:%s3]
    %17 = vst [vmem:[#allocation1] sm:%s3] %v16
    %v18 = vld [vmem:[#allocation1] ss:$8 sm:$0xf]
    %vm19 = vcmask 23552
    %20 = vst.msk [vmem:[#allocation0] sm:$0xf] %vm19, %v18
    %s21 = scalar_lea.vmem [#allocation1], 1
    %v22 = vld [vmem:[%s21] ss:$8 sm:$0xf]
    %23 = vrot.lane.b32.xlu0 %v22, 3
    %v24 = vpop.permute.xlu0 %23
    %vm25 = vcmask 48152
    %26 = vst.msk [vmem:[#allocation0] sm:$0xf] %vm25, %v24
    %s28 = ssub.s32 16, 1
    %v29 = vld [vmem:[#allocation0] sm:%s28]
    %s31 = ssub.s32 16, 1
    %32 = vst [vmem:[%s1] sm:%s31] %v29

// kernel: yolo_loss.2
$region0: #{yolo_loss.2}
  #allocation0 [shape = 'u32[]', space=smem, size = 0x4, offset = 0x4, fixed_abs, tag = 'smem constant byte address 0x4 - core index']
  #allocation1 [shape = 'u32[72,128]{1,0:T(1,128)}', space=vmem, size = 0x9000, scoped, tag = 'internal scratch']
  %s0 = inlined_call_operand.vmem [shape: f32[4,6,1], index: 0, kind: input, shape index: {}]
  %s1 = inlined_call_operand.vmem [shape: f32[6,256,5], index: 1, kind: input, shape index: {}]
  %s2 = inlined_call_operand.vmem [shape: f32[6,256,5], index: 2, kind: input, shape index: {}]
  %s3 = inlined_call_operand.vmem [shape: f32[2,1,1], index: 3, kind: output, shape index: {0}]
  %s4 = inlined_call_operand.vmem [shape: f32[2,1,1], index: 4, kind: output, shape index: {1}]
  %s5 = inlined_call_operand.vmem [shape: f32[2,1,1], index: 5, kind: output, shape index: {2}]
  %6 = xla_tuple %s3, %s4, %s5
  %s7 = sld [smem:[#allocation0]]
  $region65: #{yolo_loss.2} parent=0
    _
  %s9 = ssub.s32 1, %s7
  %s10 = scalar_select 0, %s9, %s7
  loop: start=0, step=1, limit=4
  $region2: #{yolo_loss.2} parent=0 // loop_pre_header
    _
  $region3: #{yolo_loss.2} parent=0 // loop_header
    %s12 = sphi 0, %s16
    %p13 = scmp.ge.s32.totalorder %s12, 4
    %s19 = sphi 0, %s31
    %s20 = sphi 0, %s27
    %s21 = sphi 0, %s19
    %s22 = sphi 0, %s20
    %s23 = sphi 0, %s21
    %s24 = sphi 0, %s22
    %s36 = sphi 0, %s38
    %s39 = sphi 0, %s36
    %s40 = sphi 0, %s39
    %s56 = sphi 0, %s40
    %s64 = sphi 0, %s66
    %s67 = sphi 0, %s64
    %s68 = sphi 0, %s67
    %s84 = sphi 0, %s68
    %s88 = sphi 0, %s88
    %s90 = sphi 0, %s88
    %s91 = sphi 0, %s90
    %s105 = sphi 0, %s91
    %s111 = sphi 0, %s113
    %s114 = sphi 0, %s111
    %s115 = sphi 0, %s114
    %s131 = sphi 0, %s115
    %s137 = sphi 0, %s139
    %s140 = sphi 0, %s137
    %s141 = sphi 0, %s140
    %s157 = sphi 0, %s141
    %s163 = sphi 0, %s165
    %s166 = sphi 0, %s163
    %s167 = sphi 0, %s166
    %s183 = sphi 0, %s167
  $region4: #{yolo_loss.2} parent=0 // loop_header_branch
    %15 = sbr.rel (%p13) target = $region8
  $region5: #{yolo_loss.2} parent=0 // loop_body
    %s17 = ssub.s32 %s12, 1
    %s18 = ssub.s32 %s12, 2
    %s25 = sadd.s32 1, %s20
    %p26 = scmp.ge.s32.totalorder %s25, 1
    %s27 = scalar_select %p26, 0, %s25
    %s28 = sadd.s32 1, %s19
    %s29 = scalar_select %p26, %s28, %s19
    %p30 = scmp.ge.s32.totalorder %s29, 2
    %s31 = scalar_select %p30, 0, %s29
    %s32 = sadd.s32 %s19, %s20
    %s33 = sadd.s32 %s31, %s27
    %s34 = ssub.s32 %s32, %s33
    %p35 = scmp.eq.s32.totalorder %s34, 0
    %s37 = sadd.s32 %s36, 1
    %s38 = scalar_select %p35, %s36, %s37
    %p41 = pneg %p35
    %p42 = scmp.eq.s32.totalorder %s12, 1
    %p43 = por %p41, %p42
    %p44 = scmp.ne.s32.totalorder %s36, %s39
    %p45 = scmp.eq.s32.totalorder %s12, 0
    %p46 = por %p44, %p45
    %p47 = scmp.ne.s32.totalorder %s36, %s39
    %p48 = scmp.eq.s32.totalorder %s17, 1
    %p49 = por %p47, %p48
    %p50 = scmp.ne.s32.totalorder %s39, %s40
    %p51 = scmp.eq.s32.totalorder %s17, 0
    %p52 = por %p50, %p51
    %p53 = scmp.ne.s32.totalorder %s39, %s40
    %p54 = scmp.eq.s32.totalorder %s18, 1
    %p55 = por %p53, %p54
    %p57 = scmp.ne.s32.totalorder %s40, %s56
    %p58 = scmp.eq.s32.totalorder %s18, 0
    %p59 = por %p57, %p58
    %s60 = sadd.s32 %s19, %s20
    %s61 = sadd.s32 %s31, %s27
    %s62 = ssub.s32 %s60, %s61
    %p63 = scmp.eq.s32.totalorder %s62, 0
    %s65 = sadd.s32 %s64, 1
    %s66 = scalar_select %p63, %s64, %s65
    %p69 = pneg %p63
    %p70 = scmp.eq.s32.totalorder %s12, 1
    %p71 = por %p69, %p70
    %p72 = scmp.ne.s32.totalorder %s64, %s67
    %p73 = scmp.eq.s32.totalorder %s12, 0
    %p74 = por %p72, %p73
    %p75 = scmp.ne.s32.totalorder %s64, %s67
    %p76 = scmp.eq.s32.totalorder %s17, 1
    %p77 = por %p75, %p76
    %p78 = scmp.ne.s32.totalorder %s67, %s68
    %p79 = scmp.eq.s32.totalorder %s17, 0
    %p80 = por %p78, %p79
    %p81 = scmp.ne.s32.totalorder %s67, %s68
    %p82 = scmp.eq.s32.totalorder %s18, 1
    %p83 = por %p81, %p82
    %p85 = scmp.ne.s32.totalorder %s68, %s84
    %p86 = scmp.eq.s32.totalorder %s18, 0
    %p87 = por %p85, %p86
    %s89 = sadd.s32 %s88, 1
    %p92 = scmp.eq.s32.totalorder %s12, 1
    %p93 = scmp.ne.s32.totalorder %s88, %s90
    %p94 = scmp.eq.s32.totalorder %s12, 0
    %p95 = por %p93, %p94
    %p96 = scmp.ne.s32.totalorder %s88, %s90
    %p97 = scmp.eq.s32.totalorder %s17, 1
    %p98 = por %p96, %p97
    %p99 = scmp.ne.s32.totalorder %s90, %s91
    %p100 = scmp.eq.s32.totalorder %s17, 0
    %p101 = por %p99, %p100
    %p102 = scmp.ne.s32.totalorder %s90, %s91
    %p103 = scmp.eq.s32.totalorder %s18, 1
    %p104 = por %p102, %p103
    %p106 = scmp.ne.s32.totalorder %s91, %s105
    %p107 = scmp.eq.s32.totalorder %s18, 0
    %p108 = por %p106, %p107
    %s109 = ssub.s32 %s19, %s31
    %p110 = scmp.eq.s32.totalorder %s109, 0
    %s112 = sadd.s32 %s111, 1
    %s113 = scalar_select %p110, %s111, %s112
    %p116 = pneg %p110
    %p117 = scmp.eq.s32.totalorder %s12, 1
    %p118 = por %p116, %p117
    %p119 = scmp.ne.s32.totalorder %s111, %s114
    %p120 = scmp.eq.s32.totalorder %s12, 0
    %p121 = por %p119, %p120
    %p122 = scmp.ne.s32.totalorder %s111, %s114
    %p123 = scmp.eq.s32.totalorder %s17, 1
    %p124 = por %p122, %p123
    %p125 = scmp.ne.s32.totalorder %s114, %s115
    %p126 = scmp.eq.s32.totalorder %s17, 0
    %p127 = por %p125, %p126
    %p128 = scmp.ne.s32.totalorder %s114, %s115
    %p129 = scmp.eq.s32.totalorder %s18, 1
    %p130 = por %p128, %p129
    %p132 = scmp.ne.s32.totalorder %s115, %s131
    %p133 = scmp.eq.s32.totalorder %s18, 0
    %p134 = por %p132, %p133
    %s135 = ssub.s32 %s19, %s31
    %p136 = scmp.eq.s32.totalorder %s135, 0
    %s138 = sadd.s32 %s137, 1
    %s139 = scalar_select %p136, %s137, %s138
    %p142 = pneg %p136
    %p143 = scmp.eq.s32.totalorder %s12, 1
    %p144 = por %p142, %p143
    %p145 = scmp.ne.s32.totalorder %s137, %s140
    %p146 = scmp.eq.s32.totalorder %s12, 0
    %p147 = por %p145, %p146
    %p148 = scmp.ne.s32.totalorder %s137, %s140
    %p149 = scmp.eq.s32.totalorder %s17, 1
    %p150 = por %p148, %p149
    %p151 = scmp.ne.s32.totalorder %s140, %s141
    %p152 = scmp.eq.s32.totalorder %s17, 0
    %p153 = por %p151, %p152
    %p154 = scmp.ne.s32.totalorder %s140, %s141
    %p155 = scmp.eq.s32.totalorder %s18, 1
    %p156 = por %p154, %p155
    %p158 = scmp.ne.s32.totalorder %s141, %s157
    %p159 = scmp.eq.s32.totalorder %s18, 0
    %p160 = por %p158, %p159
    %s161 = ssub.s32 %s19, %s31
    %p162 = scmp.eq.s32.totalorder %s161, 0
    %s164 = sadd.s32 %s163, 1
    %s165 = scalar_select %p162, %s163, %s164
    %p168 = pneg %p162
    %p169 = scmp.eq.s32.totalorder %s12, 1
    %p170 = por %p168, %p169
    %p171 = scmp.ne.s32.totalorder %s163, %s166
    %p172 = scmp.eq.s32.totalorder %s12, 0
    %p173 = por %p171, %p172
    %p174 = scmp.ne.s32.totalorder %s163, %s166
    %p175 = scmp.eq.s32.totalorder %s17, 1
    %p176 = por %p174, %p175
    %p177 = scmp.ne.s32.totalorder %s166, %s167
    %p178 = scmp.eq.s32.totalorder %s17, 0
    %p179 = por %p177, %p178
    %p180 = scmp.ne.s32.totalorder %s166, %s167
    %p181 = scmp.eq.s32.totalorder %s18, 1
    %p182 = por %p180, %p181
    %p184 = scmp.ne.s32.totalorder %s167, %s183
    %p185 = scmp.eq.s32.totalorder %s18, 0
    %p186 = por %p184, %p185
    %p187 = scmp.le.s32.totalorder 1, %s12
    %p188 = scmp.lt.s32.totalorder %s12, 3
    %p189 = pnand %p187, %p188
    %p190 = pneg %p189
    // Predicated region
    $region9: #{yolo_loss.2} parent=5 // pred_check
      _
    $region10: #{yolo_loss.2} parent=5 // pred_check_branch
      %192 = sbr.rel (%p189) target = $region12
    $region11: #{yolo_loss.2} parent=5 // pred_region
      %s193 = ssub.s32 %s12, 1
      // Predicated region
      $region13: #{yolo_loss.2} parent=11 // pred_check
        %p194 = pneg %p101
      $region14: #{yolo_loss.2} parent=11 // pred_check_branch
        %196 = sbr.rel (%p194) target = $region16
      $region15: #{yolo_loss.2} parent=11 // pred_region
        _
      $region16: #{yolo_loss.2} parent=11 // pred_fallthru
        _
    $region12: #{yolo_loss.2} parent=5 // pred_fallthru
      _
    %p197 = scmp.lt.s32.totalorder %s12, 2
    // Predicated region
    $region17: #{yolo_loss.2} parent=5 // pred_check
      %p198 = pneg %p197
    $region18: #{yolo_loss.2} parent=5 // pred_check_branch
      %200 = sbr.rel (%p198) target = $region20
    $region19: #{yolo_loss.2} parent=5 // pred_region
      // Predicated region
      $region21: #{yolo_loss.2} parent=19 // pred_check
        %p201 = pneg %p46
      $region22: #{yolo_loss.2} parent=19 // pred_check_branch
        %203 = sbr.rel (%p201) target = $region24
      $region23: #{yolo_loss.2} parent=19 // pred_region
        %s204 = sadd.s32 %s19, %s20
        %p205 = scmp.lt.s32.totalorder %s204, 1
        %s206 = scalar_select %p205, %s204, 1
        %s207 = smul.addr %s206, 8
        %s208 = scalar_lea.vmem %s2, %s207
        %s209 = sadd.s32 %s19, %s20
      $region24: #{yolo_loss.2} parent=19 // pred_fallthru
        _
      // Predicated region
      $region25: #{yolo_loss.2} parent=19 // pred_check
        %p210 = pneg %p74
      $region26: #{yolo_loss.2} parent=19 // pred_check_branch
        %212 = sbr.rel (%p210) target = $region28
      $region27: #{yolo_loss.2} parent=19 // pred_region
        %s213 = sadd.s32 %s19, %s20
        %p214 = scmp.lt.s32.totalorder %s213, 1
        %s215 = scalar_select %p214, %s213, 1
        %s216 = smul.addr %s215, 8
        %s217 = scalar_lea.vmem %s1, %s216
        %s218 = sadd.s32 %s19, %s20
      $region28: #{yolo_loss.2} parent=19 // pred_fallthru
        _
    $region20: #{yolo_loss.2} parent=5 // pred_fallthru
      _
    %p219 = scmp.le.s32.totalorder 1, %s12
    %p220 = scmp.lt.s32.totalorder %s12, 3
    %p221 = pnand %p219, %p220
    %p222 = pneg %p221
    // Predicated region
    $region29: #{yolo_loss.2} parent=5 // pred_check
      _
    $region30: #{yolo_loss.2} parent=5 // pred_check_branch
      %224 = sbr.rel (%p221) target = $region32
    $region31: #{yolo_loss.2} parent=5 // pred_region
      #allocation2 [shape = 'u8[20480]{0}', space=vmem, size = 0x5000, dematerialized = true, scoped, tag = 'FusionAdapter Buffer %fusion.2 = f32[5,6,256]{2,1,0:T(8,128)} fusion(%param_2.2), kind=kLoop, calls=%fused_computation.2.clone, metadata={op_name="jit(yolo_loss)/transpose" stack_frame_id=11}']
      #allocation3 [shape = 'u8[20480]{0}', space=vmem, size = 0x5000, dematerialized = true, scoped, tag = 'FusionAdapter Buffer %fusion.1 = f32[5,6,256]{2,1,0:T(8,128)} fusion(%param_1.2), kind=kLoop, calls=%fused_computation.1.clone, metadata={op_name="jit(yolo_loss)/transpose" stack_frame_id=13}']
      %s225 = ssub.s32 %s12, 1
      %s226 = sadd.s32 %s21, %s22
      %p227 = scmp.lt.s32.totalorder %s226, 1
      %s228 = scalar_select %p227, %s226, 1
      %s229 = smul.addr %s228, 8
      %s230 = scalar_lea.vmem %s2, %s229
      %p231 = pneg %p52
      %p232 = pneg %p49
      %s233 = sadd.s32 %s21, %s22
      %p234 = scmp.lt.s32.totalorder %s233, 1
      %s235 = scalar_select %p234, %s233, 1
      %s236 = smul.addr %s235, 8
      %s237 = scalar_lea.vmem %s1, %s236
      %p238 = pneg %p80
      %p239 = pneg %p77
      %p240 = pneg %p101
      %p241 = pneg %p98
      %p242 = pneg %p127
      %p243 = pneg %p124
      %p244 = scmp.lt.s32.totalorder %s21, 1
      %s245 = scalar_select %p244, %s21, 1
      %s246 = scalar_lea.vmem %s3, %s245
      %p247 = pneg %p153
      %p248 = pneg %p150
      %p249 = scmp.lt.s32.totalorder %s21, 1
      %s250 = scalar_select %p249, %s21, 1
      %s251 = scalar_lea.vmem %s4, %s250
      %p252 = pneg %p179
      %p253 = pneg %p176
      %p254 = scmp.lt.s32.totalorder %s21, 1
      %s255 = scalar_select %p254, %s21, 1
      %s256 = scalar_lea.vmem %s5, %s255
      %s257 = sadd.s32 %s21, %s22
      %p258 = scmp.lt.s32.totalorder %s257, 1
      %s259 = scalar_select %p258, %s257, 1
      %s260 = smul.addr %s259, 8
      %s261 = scalar_lea.vmem %s2, %s260
      %s262 = sadd.s32 %s21, %s22
      %s263 = sadd.s32 %s21, %s22
      %p264 = scmp.lt.s32.totalorder %s263, 1
      %s265 = scalar_select %p264, %s263, 1
      %s266 = smul.addr %s265, 8
      %s267 = scalar_lea.vmem %s1, %s266
      %s268 = sadd.s32 %s21, %s22
      %p269 = scmp.lt.s32.totalorder %s21, 1
      %s270 = scalar_select %p269, %s21, 1
      %s271 = scalar_lea.vmem %s3, %s270
      %p272 = scmp.lt.s32.totalorder %s21, 1
      %s273 = scalar_select %p272, %s21, 1
      %s274 = scalar_lea.vmem %s4, %s273
      %p275 = scmp.lt.s32.totalorder %s21, 1
      %s276 = scalar_select %p275, %s21, 1
      %s277 = scalar_lea.vmem %s5, %s276
      %v278 = vld [vmem:[%s261] sm:$0x3f]
      %s280 = ssub.s32 256, 1
      %281 = vst [vmem:[#allocation2] sm:%s280] %v278
      %s282 = scalar_lea.vmem %s261, 16
      %v283 = vld [vmem:[%s282] sm:$0x3f]
      %s284 = scalar_lea.vmem [#allocation2], 8
      %s286 = ssub.s32 256, 1
      %287 = vst [vmem:[%s284] sm:%s286] %v283
      %s288 = scalar_lea.vmem %s261, 32
      %v289 = vld [vmem:[%s288] sm:$0x3f]
      %s290 = scalar_lea.vmem [#allocation2], 16
      %s292 = ssub.s32 256, 1
      %293 = vst [vmem:[%s290] sm:%s292] %v289
      %s294 = scalar_lea.vmem %s261, 48
      %v295 = vld [vmem:[%s294] sm:$0x3f]
      %s296 = scalar_lea.vmem [#allocation2], 24
      %s298 = ssub.s32 256, 1
      %299 = vst [vmem:[%s296] sm:%s298] %v295
      %s300 = scalar_lea.vmem %s261, 64
      %v301 = vld [vmem:[%s300] sm:$0x3f]
      %s302 = scalar_lea.vmem [#allocation2], 32
      %s304 = ssub.s32 256, 1
      %305 = vst [vmem:[%s302] sm:%s304] %v301
      %v306 = vld [vmem:[%s267] sm:$0x3f]
      %s308 = ssub.s32 256, 1
      %309 = vst [vmem:[#allocation3] sm:%s308] %v306
      %s310 = scalar_lea.vmem %s267, 16
      %v311 = vld [vmem:[%s310] sm:$0x3f]
      %s312 = scalar_lea.vmem [#allocation3], 8
      %s314 = ssub.s32 256, 1
      %315 = vst [vmem:[%s312] sm:%s314] %v311
      %s316 = scalar_lea.vmem %s267, 32
      %v317 = vld [vmem:[%s316] sm:$0x3f]
      %s318 = scalar_lea.vmem [#allocation3], 16
      %s320 = ssub.s32 256, 1
      %321 = vst [vmem:[%s318] sm:%s320] %v317
      %s322 = scalar_lea.vmem %s267, 48
      %v323 = vld [vmem:[%s322] sm:$0x3f]
      %s324 = scalar_lea.vmem [#allocation3], 24
      %s326 = ssub.s32 256, 1
      %327 = vst [vmem:[%s324] sm:%s326] %v323
      %s328 = scalar_lea.vmem %s267, 64
      %v329 = vld [vmem:[%s328] sm:$0x3f]
      %s330 = scalar_lea.vmem [#allocation3], 32
      %s332 = ssub.s32 256, 1
      %333 = vst [vmem:[%s330] sm:%s332] %v329
      %p334 = scmp.eq.s32.totalorder %s22, 0
      // Predicated region
      $region33: #{yolo_loss.2} parent=31 // pred_check
        %p335 = pneg %p334
      $region34: #{yolo_loss.2} parent=31 // pred_check_branch
        %337 = sbr.rel (%p335) target = $region36
      $region35: #{yolo_loss.2} parent=31 // pred_region
        %vm338 = vcmask 0
        %339 = vst.msk [vmem:[%s271] sm:$0x1] %vm338, 0.0
        %340 = vst.msk [vmem:[%s274] sm:$0x1] %vm338, 0.0
        %341 = vst.msk [vmem:[%s277] sm:$0x1] %vm338, 0.0
      $region36: #{yolo_loss.2} parent=31 // pred_fallthru
        _
      %v342 = vld [vmem:[#allocation2] sm:$0x3f]
      %s343 = scalar_lea.vmem [#allocation2], 8
      %v344 = vld [vmem:[%s343] sm:$0x3f]
      %s345 = scalar_lea.vmem [#allocation2], 16
      %v346 = vld [vmem:[%s345] sm:$0x3f]
      %s347 = scalar_lea.vmem [#allocation2], 24
      %v348 = vld [vmem:[%s347] sm:$0x3f]
      %s349 = scalar_lea.vmem [#allocation2], 32
      %v350 = vld [vmem:[%s349] sm:$0x3f]
      %v351 = vld [vmem:[#allocation3] sm:$0x3f]
      %s352 = scalar_lea.vmem [#allocation3], 8
      %v353 = vld [vmem:[%s352] sm:$0x3f]
      %s354 = scalar_lea.vmem [#allocation3], 16
      %v355 = vld [vmem:[%s354] sm:$0x3f]
      %s356 = scalar_lea.vmem [#allocation3], 24
      %v357 = vld [vmem:[%s356] sm:$0x3f]
      %s358 = scalar_lea.vmem [#allocation3], 32
      %v359 = vld [vmem:[%s358] sm:$0x3f]
      %v360 = vld [vmem:[%s0] sm:$0x3f]
      %s361 = scalar_lea.vmem %s0, 8
      %v362 = vld [vmem:[%s361] sm:$0x3f]
      %s363 = scalar_lea.vmem %s0, 16
      %v364 = vld [vmem:[%s363] sm:$0x3f]
      %s365 = scalar_lea.vmem %s0, 24
      %v366 = vld [vmem:[%s365] sm:$0x3f]
      %vm367 = vcmp.eq.f32.partialorder %v351, 1.0
      %v368 = vsel %vm367, 1, 0
      %v369 = vcvt.s32.f32 %v368
      %v370 = vld [vmem:[%s271] sm:$0x1]
      %vm371 = vcmask 1045504
      %v372 = vsel %vm371, %v369, 0.0
      %373 = vadd.xlane.f32.xlu0 %v372
      %v374 = vpop.xlane.xlu0 %373
      %v375 = vrot.slane %v374, 4
      %v376 = vadd.f32 %v374, %v375
      %v377 = vrot.slane %v376, 2
      %v378 = vadd.f32 %v376, %v377
      %v379 = vrot.slane %v378, 1
      %v380 = vadd.f32 %v378, %v379
      %s381 = vtos %v380
      %v382 = vstv %s381
      %v383 = vadd.f32 %v370, %v382
      %vm384 = vcmask 0
      %385 = vst.msk [vmem:[%s271] sm:$0x1] %vm384, %v383
      %v386 = vsub.f32 0.0, %v344
      %v387 = vmul.f32 %v386, 1.442695
      %v388 = vpow.pop %v387
      %v389 = vadd.f32 %v388, 1.0
      %v390 = vrcp.pop %v389
      %v391 = vsub.f32 0.0, %v346
      %v392 = vmul.f32 %v391, 1.442695
      %v393 = vpow.pop %v392
      %v394 = vadd.f32 %v393, 1.0
      %v395 = vrcp.pop %v394
      %397 = vset.pattern.permute.xlu0 0
      %398 = vperm.xlu0 %397, %v364
      %v399 = vpop.permute.xlu0 %398
      %v401 = vmul.f32 %v357, %v399
      %v402 = vadd.f32 %v401, 1e-15
      %v403 = vlog2.pop %v402
      %v404 = vmul.f32 %v403, 0.6931472
      %406 = vset.pattern.permute.xlu0 0
      %407 = vperm.xlu0 %406, %v366
      %v408 = vpop.permute.xlu0 %407
      %v410 = vmul.f32 %v359, %v408
      %v411 = vadd.f32 %v410, 1e-15
      %v412 = vlog2.pop %v411
      %v413 = vmul.f32 %v412, 0.6931472
      %v414 = vsub.f32 %v390, %v353
      %v415 = vmul.f32 %v414, %v414
      %v416 = vsub.f32 %v395, %v355
      %v417 = vmul.f32 %v416, %v416
      %v418 = vadd.f32 %v415, %v417
      %v419 = vsub.f32 %v348, %v404
      %v420 = vmul.f32 %v419, %v419
      %v421 = vadd.f32 %v418, %v420
      %v422 = vsub.f32 %v350, %v413
      %v423 = vmul.f32 %v422, %v422
      %v424 = vadd.f32 %v421, %v423
      %v425 = vld [vmem:[%s274] sm:$0x1]
      %v426 = vmul.f32 %v369, %v424
      %v427 = vsel %vm371, %v426, 0.0
      %428 = vadd.xlane.f32.xlu0 %v427
      %v429 = vpop.xlane.xlu0 %428
      %v430 = vrot.slane %v429, 4
      %v431 = vadd.f32 %v429, %v430
      %v432 = vrot.slane %v431, 2
      %v433 = vadd.f32 %v431, %v432
      %v434 = vrot.slane %v433, 1
      %v435 = vadd.f32 %v433, %v434
      %s436 = vtos %v435
      %v437 = vstv %s436
      %v438 = vadd.f32 %v425, %v437
      %439 = vst.msk [vmem:[%s274] sm:$0x1] %vm384, %v438
      %v440 = vsub.f32 0.0, %v390
      %v441 = vmul.f32 %v440, 1.442695
      %v442 = vpow.pop %v441
      %v443 = vadd.f32 %v442, 1.0
      %v444 = vrcp.pop %v443
      %v445 = vsub.f32 0.0, %v395
      %v446 = vmul.f32 %v445, 1.442695
      %v447 = vpow.pop %v446
      %v448 = vadd.f32 %v447, 1.0
      %v449 = vrcp.pop %v448
      %v450 = vmul.f32 %v348, 1.442695
      %v451 = vpow.pop %v450
      %453 = vset.pattern.permute.xlu0 0
      %454 = vperm.xlu0 %453, %v360
      %v455 = vpop.permute.xlu0 %454
      %v457 = vmul.f32 %v451, %v455
      %v458 = vmul.f32 %v350, 1.442695
      %v459 = vpow.pop %v458
      %461 = vset.pattern.permute.xlu0 0
      %462 = vperm.xlu0 %461, %v362
      %v463 = vpop.permute.xlu0 %462
      %v465 = vmul.f32 %v459, %v463
      %v466 = vmul.f32 %v457, 0.5
      %v467 = vsub.f32 %v444, %v466
      %v468 = vadd.f32 %v444, %v466
      %v469 = vmul.f32 %v465, 0.5
      %v470 = vsub.f32 %v449, %v469
      %v471 = vadd.f32 %v449, %v469
      %v472 = vmul.f32 %v404, 0.5
      %v473 = vsub.f32 %v353, %v472
      %v474 = vadd.f32 %v353, %v472
      %v475 = vmul.f32 %v413, 0.5
      %v476 = vsub.f32 %v355, %v475
      %v477 = vadd.f32 %v355, %v475
      %v478 = vmin.f32 %v468, %v474
      %v479 = vmax.f32 %v467, %v473
      %v480 = vsub.f32 %v478, %v479
      %v481 = vmax.f32 %v480, 0.0
      %v482 = vmin.f32 %v471, %v477
      %v483 = vmax.f32 %v470, %v476
      %v484 = vsub.f32 %v482, %v483
      %v485 = vmax.f32 %v484, 0.0
      %v486 = vmul.f32 %v481, %v485
      %v487 = vsub.f32 %v468, %v467
      %v488 = vsub.f32 %v471, %v470
      %v489 = vmul.f32 %v487, %v488
      %v490 = vand.u32 2147483647, %v489
      %v491 = vsub.f32 %v474, %v473
      %v492 = vsub.f32 %v477, %v476
      %v493 = vmul.f32 %v491, %v492
      %v494 = vand.u32 2147483647, %v493
      %v495 = vadd.f32 %v490, %v494
      %v496 = vsub.f32 %v495, %v486
      %v497 = vadd.f32 %v496, 1e-06
      %v498 = vrcp.pop %v497
      %v499 = vmul.f32 %v486, %v498
      %v500 = vsub.f32 0.0, %v342
      %v501 = vmul.f32 %v500, 1.442695
      %v502 = vpow.pop %v501
      %v503 = vadd.f32 %v502, 1.0
      %v504 = vrcp.pop %v503
      %v505 = vmul.f32 %v499, %v351
      %v506 = vsub.f32 %v504, %v505
      %v507 = vmul.f32 %v506, %v506
      %v508 = vld [vmem:[%s277] sm:$0x1]
      %v509 = vmul.f32 %v369, %v507
      %v510 = vsel %vm371, %v509, 0.0
      %511 = vadd.xlane.f32.xlu0 %v510
      %v512 = vpop.xlane.xlu0 %511
      %v513 = vrot.slane %v512, 4
      %v514 = vadd.f32 %v512, %v513
      %v515 = vrot.slane %v514, 2
      %v516 = vadd.f32 %v514, %v515
      %v517 = vrot.slane %v516, 1
      %v518 = vadd.f32 %v516, %v517
      %s519 = vtos %v518
      %v520 = vstv %s519
      %v521 = vadd.f32 %v508, %v520
      %522 = vst.msk [vmem:[%s277] sm:$0x1] %vm384, %v521
      %p523 = scmp.lt.s32.totalorder %s21, 1
      %s524 = scalar_select %p523, %s21, 1
      %s525 = scalar_lea.vmem %s3, %s524
      %p526 = scmp.lt.s32.totalorder %s21, 1
      %s527 = scalar_select %p526, %s21, 1
      %s528 = scalar_lea.vmem %s4, %s527
      %p529 = scmp.lt.s32.totalorder %s21, 1
      %s530 = scalar_select %p529, %s21, 1
      %s531 = scalar_lea.vmem %s5, %s530
      // Predicated region
      $region37: #{yolo_loss.2} parent=31 // pred_check
        %p532 = pneg %p124
      $region38: #{yolo_loss.2} parent=31 // pred_check_branch
        %534 = sbr.rel (%p532) target = $region40
      $region39: #{yolo_loss.2} parent=31 // pred_region
        _
      $region40: #{yolo_loss.2} parent=31 // pred_fallthru
        _
      // Predicated region
      $region41: #{yolo_loss.2} parent=31 // pred_check
        %p535 = pneg %p150
      $region42: #{yolo_loss.2} parent=31 // pred_check_branch
        %537 = sbr.rel (%p535) target = $region44
      $region43: #{yolo_loss.2} parent=31 // pred_region
        _
      $region44: #{yolo_loss.2} parent=31 // pred_fallthru
        _
      // Predicated region
      $region45: #{yolo_loss.2} parent=31 // pred_check
        %p538 = pneg %p176
      $region46: #{yolo_loss.2} parent=31 // pred_check_branch
        %540 = sbr.rel (%p538) target = $region48
      $region47: #{yolo_loss.2} parent=31 // pred_region
        _
      $region48: #{yolo_loss.2} parent=31 // pred_fallthru
        _
    $region32: #{yolo_loss.2} parent=5 // pred_fallthru
      _
    %p541 = scmp.le.s32.totalorder 2, %s12
    // Predicated region
    $region49: #{yolo_loss.2} parent=5 // pred_check
      %p542 = pneg %p541
    $region50: #{yolo_loss.2} parent=5 // pred_check_branch
      %544 = sbr.rel (%p542) target = $region52
    $region51: #{yolo_loss.2} parent=5 // pred_region
      %s545 = ssub.s32 %s12, 2
      // Predicated region
      $region53: #{yolo_loss.2} parent=51 // pred_check
        %p546 = pneg %p130
      $region54: #{yolo_loss.2} parent=51 // pred_check_branch
        %548 = sbr.rel (%p546) target = $region56
      $region55: #{yolo_loss.2} parent=51 // pred_region
        %p549 = scmp.lt.s32.totalorder %s23, 1
        %s550 = scalar_select %p549, %s23, 1
        %s551 = scalar_lea.vmem %s3, %s550
      $region56: #{yolo_loss.2} parent=51 // pred_fallthru
        _
      // Predicated region
      $region57: #{yolo_loss.2} parent=51 // pred_check
        %p552 = pneg %p156
      $region58: #{yolo_loss.2} parent=51 // pred_check_branch
        %554 = sbr.rel (%p552) target = $region60
      $region59: #{yolo_loss.2} parent=51 // pred_region
        %p555 = scmp.lt.s32.totalorder %s23, 1
        %s556 = scalar_select %p555, %s23, 1
        %s557 = scalar_lea.vmem %s4, %s556
      $region60: #{yolo_loss.2} parent=51 // pred_fallthru
        _
      // Predicated region
      $region61: #{yolo_loss.2} parent=51 // pred_check
        %p558 = pneg %p182
      $region62: #{yolo_loss.2} parent=51 // pred_check_branch
        %560 = sbr.rel (%p558) target = $region64
      $region63: #{yolo_loss.2} parent=51 // pred_region
        %p561 = scmp.lt.s32.totalorder %s23, 1
        %s562 = scalar_select %p561, %s23, 1
        %s563 = scalar_lea.vmem %s5, %s562
      $region64: #{yolo_loss.2} parent=51 // pred_fallthru
        _
    $region52: #{yolo_loss.2} parent=5 // pred_fallthru
      _
  $region6: #{yolo_loss.2} parent=0 // loop_footer
    %s16 = sadd.s32 1, %s12
  $region7: #{yolo_loss.2} parent=0 // loop_footer_branch
    %11 = sbr.rel target = $region3
  $region8: #{yolo_loss.2} parent=0 // loop_exit
    _

</llo_original>
